<compile_context>
chip_gen: v5e
topology: v5e:2x2
jax: 0.10.0
libtpu: 0.0.40
codegen_flags: <defaults>
</compile_context>

<pallas_src>
import jax
import jax.numpy as jnp
from jax.experimental import pallas as pl
from jax.experimental.pallas import tpu as pltpu

_LANES = 128


def _round_up(x, m):
    return ((x + m - 1) // m) * m


def _dqn_kernel(scal_ref, x_ref, w1_ref, b1_ref, w2_ref, b2_ref, w3_ref, o_ref):
    """One batch tile: x (TB, D_in) -> o (1, TB) (batch on lanes, lane-dense)."""
    # fc1 + relu (MXU, f32 accumulation; zero-padded fc1 lanes stay exactly 0).
    h1 = jnp.dot(x_ref[...], w1_ref[...], preferred_element_type=jnp.float32)
    h1 = jnp.maximum(h1 + b1_ref[...], 0.0)
    # fc2 + relu (padded fc2 lanes stay exactly 0).
    h2 = jnp.dot(h1.astype(w2_ref.dtype), w2_ref[...],
                 preferred_element_type=jnp.float32)
    h2 = jnp.maximum(h2 + b2_ref[...], 0.0)                     # (TB, 128)
    # fc3 head (fc2 -> 1), lane-dense: contract the LAST dims of
    # w3_rep (8, 128) and h2 (TB, 128) -> (8, TB), batch on lanes
    # (same A @ B^T contraction pattern as q @ k^T in flash attention).
    # w3 is replicated over 8 sublanes in the wrapper; row 0 is used.
    v = jax.lax.dot_general(
        w3_ref[...], h2,
        dimension_numbers=(((1,), (1,)), ((), ())),
        preferred_element_type=jnp.float32)[0:1, :]             # (1, TB)
    # Runtime scalars in SMEM: [act_lo, act_hi, b3].
    act_lo = scal_ref[0]
    act_hi = scal_ref[1]
    b3 = scal_ref[2]
    v = jax.nn.sigmoid(v + b3)
    v = v * (act_hi - act_lo) + act_lo
    o_ref[...] = v.astype(o_ref.dtype)


def dqn_forward(state, params, action_range, *, batch_tile=1024, use_bf16=False):
    """state: [B, D_in] float32 -> [B, 1] float32 action values."""
    w1, b1 = params["w1"], params["b1"]
    w2, b2 = params["w2"], params["b2"]
    w3, b3 = params["w3"], params["b3"]

    B, d_in = state.shape
    fc1 = w1.shape[1]
    fc2 = w2.shape[1]
    fc1_p = _round_up(fc1, _LANES)
    fc2_p = _round_up(fc2, _LANES)

    # Batch tile: multiple of 128 (lane-dense output block), clamped so the
    # per-tile footprint stays inside v5e's 16 MiB scoped VMEM default and
    # v7x's ~24 MiB/tile budget.  For B <= batch_tile this is one grid step;
    # for large B many tiles are produced and megacore splits them.
    tb = min(_round_up(max(batch_tile, 1), _LANES), 4096)
    tb = min(tb, _round_up(B, _LANES))
    b_pad = _round_up(B, tb)
    if b_pad != B:
        state = jnp.pad(state, ((0, b_pad - B), (0, 0)))

    # Zero-pad hidden widths to full 128-lane vregs (zeros are inert through
    # relu and the head contraction).  d_in is intentionally NOT padded.
    w1p = jnp.pad(w1, ((0, 0), (0, fc1_p - fc1)))
    b1p = jnp.pad(b1.reshape(1, fc1), ((0, 0), (0, fc1_p - fc1)))
    w2p = jnp.pad(w2, ((0, fc1_p - fc1), (0, fc2_p - fc2)))
    b2p = jnp.pad(b2.reshape(1, fc2), ((0, 0), (0, fc2_p - fc2)))
    # (fc2, 1) head column -> padded row replicated over 8 sublanes so the
    # head matmul has a full-sublane LHS.  (Only valid because head width == 1.)
    w3_rep = jnp.tile(jnp.pad(w3.reshape(1, fc2), ((0, 0), (0, fc2_p - fc2))),
                      (8, 1))

    if use_bf16:
        # Optional: halves the dominant HBM stream (state read).  Bias / relu /
        # head math stays f32 (preferred_element_type=f32 on both MXU dots).
        state = state.astype(jnp.bfloat16)
        w1p = w1p.astype(jnp.bfloat16)
        w2p = w2p.astype(jnp.bfloat16)

    # Runtime scalars in SMEM (no recompile when action_range / b3 change).
    lo_hi = jnp.asarray(action_range, jnp.float32).reshape(-1)[:2]
    scalars = jnp.concatenate([lo_hi, b3.reshape(-1).astype(jnp.float32)])

    def resident(shape):
        # Full-array block whose index never changes across the grid -> stays
        # VMEM-resident, DMA'd once.
        n = len(shape)
        return pl.BlockSpec(shape, lambda i, _n=n: (0,) * _n)

    grid = (b_pad // tb,)

    out = pl.pallas_call(
        _dqn_kernel,
        out_shape=jax.ShapeDtypeStruct((1, b_pad), jnp.float32),
        grid=grid,
        in_specs=[
            pl.BlockSpec(memory_space=pltpu.MemorySpace.SMEM),   # [lo, hi, b3]
            pl.BlockSpec((tb, d_in), lambda i: (i, 0)),          # state tile
            resident((d_in, fc1_p)),                             # W1
            resident((1, fc1_p)),                                # b1
            resident((fc1_p, fc2_p)),                            # W2
            resident((1, fc2_p)),                                # b2
            resident((8, fc2_p)),                                # w3 (replicated row)
        ],
        out_specs=pl.BlockSpec((1, tb), lambda i: (0, i)),       # lane-dense
        compiler_params=pltpu.CompilerParams(
            dimension_semantics=("parallel",)),                  # both TCs on v7x
    )(scalars, state, w1p, b1p, w2p, b2p, w3_rep)

    # (1, b_pad) lane-dense row -> (B, 1) module output.
    return out[0, :B].reshape(B, 1)


def init_params(key, in_dim, fc1_dims, fc2_dims):
    """Deterministic init mimicking torch.nn.Linear (uniform(-1/sqrt(fan_in), ...))."""
    ks = jax.random.split(key, 6)

    def linear(kw, kb, fan_in, fan_out):
        bound = 1.0 / jnp.sqrt(jnp.asarray(fan_in, jnp.float32))
        w = jax.random.uniform(kw, (fan_in, fan_out), jnp.float32, -bound, bound)
        b = jax.random.uniform(kb, (1, fan_out), jnp.float32, -bound, bound)
        return w, b

    w1, b1 = linear(ks[0], ks[1], in_dim, fc1_dims)
    w2, b2 = linear(ks[2], ks[3], fc1_dims, fc2_dims)
    w3, b3 = linear(ks[4], ks[5], fc2_dims, 1)
    return {"w1": w1, "b1": b1, "w2": w2, "b2": b2, "w3": w3, "b3": b3}


def dqn_reference(state, params, action_range):
    h1 = jnp.maximum(state @ params["w1"] + params["b1"], 0.0)
    h2 = jnp.maximum(h1 @ params["w2"] + params["b2"], 0.0)
    v = jax.nn.sigmoid(h2 @ params["w3"] + params["b3"])
    return v * (action_range[1] - action_range[0]) + action_range[0]


if __name__ == "__main__":
    key = jax.random.PRNGKey(0)
    k_param, k_state = jax.random.split(key)

    # Batched workload; module-level dims stay small: D_in=32, fc1=64, fc2=32, head=1.
    B = 512
    input_dims = (32,)
    fc1_dims = 64
    fc2_dims = 32
    action_range = (-2.0, 2.0)

    params = init_params(k_param, input_dims[0], fc1_dims, fc2_dims)
    state = jax.random.normal(k_state, (B, input_dims[0]), jnp.float32)

    out = dqn_forward(state, params, action_range)   # default batch_tile=1024 -> 1 grid step
    out = jax.block_until_ready(out)

    ref = dqn_reference(state, params, action_range)
    assert out.shape == (B, 1), out.shape
    max_err = float(jnp.max(jnp.abs(out - ref)))
    assert jnp.allclose(out, ref, atol=1e-4, rtol=1e-4), max_err
    print("KERNEL_OK")
</pallas_src>

<mosaic_0001>
module attributes {stable_mosaic.version = 11 : i64} {
  func.func @_dqn_kernel(%arg0: i32, %arg1: memref<3xf32, #tpu.memory_space<smem>>, %arg2: memref<512x32xf32, #tpu.memory_space<vmem>>, %arg3: memref<32x128xf32, #tpu.memory_space<vmem>>, %arg4: memref<1x128xf32, #tpu.memory_space<vmem>>, %arg5: memref<128x128xf32, #tpu.memory_space<vmem>>, %arg6: memref<1x128xf32, #tpu.memory_space<vmem>>, %arg7: memref<8x128xf32, #tpu.memory_space<vmem>>, %arg8: memref<1x512xf32, #tpu.memory_space<vmem>>) attributes {dimension_semantics = [#tpu.dimension_semantics<parallel>], iteration_bounds = array<i64: 1>, scalar_prefetch = 0 : i64, scratch_operands = 0 : i64, tpu.core_type = #tpu.core_type<tc>, window_params = [{transform_indices = @transform_0, window_bounds = array<i64: 3>}, {transform_indices = @transform_1, window_bounds = array<i64: 512, 32>}, {pipeline_mode = #tpu.pipeline_mode<synchronous>, transform_indices = @transform_2, window_bounds = array<i64: 32, 128>}, {pipeline_mode = #tpu.pipeline_mode<synchronous>, transform_indices = @transform_3, window_bounds = array<i64: 1, 128>}, {pipeline_mode = #tpu.pipeline_mode<synchronous>, transform_indices = @transform_4, window_bounds = array<i64: 128, 128>}, {pipeline_mode = #tpu.pipeline_mode<synchronous>, transform_indices = @transform_5, window_bounds = array<i64: 1, 128>}, {pipeline_mode = #tpu.pipeline_mode<synchronous>, transform_indices = @transform_6, window_bounds = array<i64: 8, 128>}, {transform_indices = @transform_7, window_bounds = array<i64: 1, 512>}]} {
    %c0 = arith.constant 0 : index
    %c0_0 = arith.constant 0 : index
    %0 = vector.load %arg2[%c0, %c0_0] : memref<512x32xf32, #tpu.memory_space<vmem>>, vector<512x32xf32>
    %c0_1 = arith.constant 0 : index
    %c0_2 = arith.constant 0 : index
    %1 = vector.load %arg3[%c0_1, %c0_2] : memref<32x128xf32, #tpu.memory_space<vmem>>, vector<32x128xf32>
    %cst = arith.constant dense<0.000000e+00> : vector<512x128xf32>
    %2 = tpu.matmul %0, %1, %cst {dimension_numbers = #tpu.dot_dimension_numbers<[1], [0], [0], [1], [0, 0, 1, 1], [], []>} : vector<512x32xf32>, vector<32x128xf32>, vector<512x128xf32> -> vector<512x128xf32>
    %c0_3 = arith.constant 0 : index
    %c0_4 = arith.constant 0 : index
    %3 = vector.load %arg4[%c0_3, %c0_4] : memref<1x128xf32, #tpu.memory_space<vmem>>, vector<1x128xf32>
    %4 = vector.broadcast %3 : vector<1x128xf32> to vector<512x128xf32>
    %5 = arith.addf %2, %4 : vector<512x128xf32>
    %cst_5 = arith.constant 0.000000e+00 : f32
    %6 = vector.broadcast %cst_5 : f32 to vector<512x128xf32>
    %7 = arith.maximumf %5, %6 : vector<512x128xf32>
    %c0_6 = arith.constant 0 : index
    %c0_7 = arith.constant 0 : index
    %8 = vector.load %arg5[%c0_6, %c0_7] : memref<128x128xf32, #tpu.memory_space<vmem>>, vector<128x128xf32>
    %cst_8 = arith.constant dense<0.000000e+00> : vector<512x128xf32>
    %9 = tpu.matmul %7, %8, %cst_8 {dimension_numbers = #tpu.dot_dimension_numbers<[1], [0], [0], [1], [0, 0, 1, 1], [], []>} : vector<512x128xf32>, vector<128x128xf32>, vector<512x128xf32> -> vector<512x128xf32>
    %c0_9 = arith.constant 0 : index
    %c0_10 = arith.constant 0 : index
    %10 = vector.load %arg6[%c0_9, %c0_10] : memref<1x128xf32, #tpu.memory_space<vmem>>, vector<1x128xf32>
    %11 = vector.broadcast %10 : vector<1x128xf32> to vector<512x128xf32>
    %12 = arith.addf %9, %11 : vector<512x128xf32>
    %cst_11 = arith.constant 0.000000e+00 : f32
    %13 = vector.broadcast %cst_11 : f32 to vector<512x128xf32>
    %14 = arith.maximumf %12, %13 : vector<512x128xf32>
    %c0_12 = arith.constant 0 : index
    %c0_13 = arith.constant 0 : index
    %15 = vector.load %arg7[%c0_12, %c0_13] : memref<8x128xf32, #tpu.memory_space<vmem>>, vector<8x128xf32>
    %cst_14 = arith.constant dense<0.000000e+00> : vector<8x512xf32>
    %16 = tpu.matmul %15, %14, %cst_14 {dimension_numbers = #tpu.dot_dimension_numbers<[1], [1], [0], [0], [0, 0, 1, 0], [], []>} : vector<8x128xf32>, vector<512x128xf32>, vector<8x512xf32> -> vector<8x512xf32>
    %17 = vector.extract_strided_slice %16 {offsets = [0, 0], sizes = [1, 512], strides = [1, 1]} : vector<8x512xf32> to vector<1x512xf32>
    %c0_15 = arith.constant 0 : index
    %18 = memref.load %arg1[%c0_15] : memref<3xf32, #tpu.memory_space<smem>>
    %c1 = arith.constant 1 : index
    %19 = memref.load %arg1[%c1] : memref<3xf32, #tpu.memory_space<smem>>
    %c2 = arith.constant 2 : index
    %20 = memref.load %arg1[%c2] : memref<3xf32, #tpu.memory_space<smem>>
    %21 = vector.broadcast %20 : f32 to vector<1x512xf32>
    %22 = arith.addf %17, %21 : vector<1x512xf32>
    %23 = arith.negf %22 : vector<1x512xf32>
    %24 = math.exp %23 : vector<1x512xf32>
    %cst_16 = arith.constant 1.000000e+00 : f32
    %25 = vector.broadcast %cst_16 : f32 to vector<1x512xf32>
    %26 = arith.addf %25, %24 : vector<1x512xf32>
    %27 = arith.divf %25, %26 : vector<1x512xf32>
    %28 = arith.subf %19, %18 : f32
    %29 = vector.broadcast %28 : f32 to vector<1x512xf32>
    %30 = arith.mulf %27, %29 : vector<1x512xf32>
    %31 = vector.broadcast %18 : f32 to vector<1x512xf32>
    %32 = arith.addf %30, %31 : vector<1x512xf32>
    %c0_17 = arith.constant 0 : index
    %c0_18 = arith.constant 0 : index
    %33 = vector.load %arg8[%c0_17, %c0_18] : memref<1x512xf32, #tpu.memory_space<vmem>>, vector<1x512xf32>
    tpu.vector_store %arg8[%c0_17, %c0_18], %32 {strides = array<i32>} : memref<1x512xf32, #tpu.memory_space<vmem>>, vector<1x512xf32>,
    return
  }
  func.func @transform_0(%arg0: i32) -> i32 {
    %c0_i32 = arith.constant 0 : i32
    %c0_i32_0 = arith.constant 0 : i32
    return %c0_i32 : i32
  }
  func.func @transform_1(%arg0: i32) -> (i32, i32) {
    %c0_i32 = arith.constant 0 : i32
    %c0_i32_0 = arith.constant 0 : i32
    return %arg0, %c0_i32 : i32, i32
  }
  func.func @transform_2(%arg0: i32) -> (i32, i32) {
    %c0_i32 = arith.constant 0 : i32
    %c0_i32_0 = arith.constant 0 : i32
    %c0_i32_1 = arith.constant 0 : i32
    return %c0_i32, %c0_i32_0 : i32, i32
  }
  func.func @transform_3(%arg0: i32) -> (i32, i32) {
    %c0_i32 = arith.constant 0 : i32
    %c0_i32_0 = arith.constant 0 : i32
    %c0_i32_1 = arith.constant 0 : i32
    return %c0_i32, %c0_i32_0 : i32, i32
  }
  func.func @transform_4(%arg0: i32) -> (i32, i32) {
    %c0_i32 = arith.constant 0 : i32
    %c0_i32_0 = arith.constant 0 : i32
    %c0_i32_1 = arith.constant 0 : i32
    return %c0_i32, %c0_i32_0 : i32, i32
  }
  func.func @transform_5(%arg0: i32) -> (i32, i32) {
    %c0_i32 = arith.constant 0 : i32
    %c0_i32_0 = arith.constant 0 : i32
    %c0_i32_1 = arith.constant 0 : i32
    return %c0_i32, %c0_i32_0 : i32, i32
  }
  func.func @transform_6(%arg0: i32) -> (i32, i32) {
    %c0_i32 = arith.constant 0 : i32
    %c0_i32_0 = arith.constant 0 : i32
    %c0_i32_1 = arith.constant 0 : i32
    return %c0_i32, %c0_i32_0 : i32, i32
  }
  func.func @transform_7(%arg0: i32) -> (i32, i32) {
    %c0_i32 = arith.constant 0 : i32
    %c0_i32_0 = arith.constant 0 : i32
    return %c0_i32, %arg0 : i32, i32
  }
}

</mosaic_0001>

<llo_original>
// kernel: tpu_custom_call.1
$region0: #{tpu_custom_call.1}
  #allocation0 [shape = 'u32[]', space=smem, size = 0x4, offset = 0x4, fixed_abs, tag = 'smem constant byte address 0x4 - core index']
  #allocation1 [shape = 'u32[72,128]{1,0:T(1,128)}', space=vmem, size = 0x9000, scoped, tag = 'internal scratch']
  %s0 = inlined_call_operand.vmem [shape: f32[3], index: 0, kind: input, shape index: {}]
  %s1 = inlined_call_operand.vmem [shape: f32[512,32], index: 1, kind: input, shape index: {}]
  %s2 = inlined_call_operand.vmem [shape: f32[32,128], index: 2, kind: input, shape index: {}]
  %s3 = inlined_call_operand.vmem [shape: f32[1,128], index: 3, kind: input, shape index: {}]
  %s4 = inlined_call_operand.vmem [shape: f32[128,128], index: 4, kind: input, shape index: {}]
  %s5 = inlined_call_operand.vmem [shape: f32[1,128], index: 5, kind: input, shape index: {}]
  %s6 = inlined_call_operand.vmem [shape: f32[8,128], index: 6, kind: input, shape index: {}]
  %s7 = inlined_call_operand.hbm [shape: f32[1,512], index: 7, kind: output, shape index: {}]
  %s8 = sld [smem:[#allocation0]]
  $region42: #{tpu_custom_call.1} parent=0
    _
  %s10 = ssub.s32 1, %s8
  %s11 = scalar_select 0, %s10, %s8
  $region1: #{tpu_custom_call.1} parent=0
    #allocation2 [shape = 'u8[512]{0}', space=smem, size = 0x200, scoped, tag = 'input window, operand 0, single buffered']
    #allocation3 [shape = 's32[1]{0}', space=sflag, size = 0x4, scoped, tag = 'scoped memory for tpu_custom_call.1']
    #allocation4 [shape = 's32[1]{0}', space=sflag, size = 0x4, scoped, tag = 'scoped memory for tpu_custom_call.1']
    #allocation5 [shape = 'u8[2048]{0}', space=vmem, size = 0x800, scoped, tag = 'output window, operand 0, single buffered']
    %12 = vsyncpa [#allocation4], 0
    %13 = vsyncpa [#allocation3], 0
    // Predicated region
    $region2: #{tpu_custom_call.1} parent=1 // pred_check
      _
    $region3: #{tpu_custom_call.1} parent=1 // pred_check_branch
      %15 = sbr.rel (0) target = $region5
    $region4: #{tpu_custom_call.1} parent=1 // pred_region
      %17 = vsyncadd [#allocation4], 0
      %s19 = sshll.u32 %s0, 4
      %s20 = int_to_ptr.vmem [resolvable:$true] %s19
      %22 = dma.vmem_to_smem %s20, 16, [#allocation2], [#allocation4]
    $region5: #{tpu_custom_call.1} parent=1 // pred_fallthru
      _
    // Predicated region
    $region6: #{tpu_custom_call.1} parent=1 // pred_check
      _
    $region7: #{tpu_custom_call.1} parent=1 // pred_check_branch
      %24 = sbr.rel (0) target = $region9
    $region8: #{tpu_custom_call.1} parent=1 // pred_region
      _
    $region9: #{tpu_custom_call.1} parent=1 // pred_fallthru
      _
    // Predicated region
    $region10: #{tpu_custom_call.1} parent=1 // pred_check
      _
    $region11: #{tpu_custom_call.1} parent=1 // pred_check_branch
      %26 = sbr.rel (0) target = $region13
    $region12: #{tpu_custom_call.1} parent=1 // pred_region
      _
    $region13: #{tpu_custom_call.1} parent=1 // pred_fallthru
      _
    // Predicated region
    $region14: #{tpu_custom_call.1} parent=1 // pred_check
      _
    $region15: #{tpu_custom_call.1} parent=1 // pred_check_branch
      %28 = sbr.rel (0) target = $region17
    $region16: #{tpu_custom_call.1} parent=1 // pred_region
      _
    $region17: #{tpu_custom_call.1} parent=1 // pred_fallthru
      _
    // Predicated region
    $region18: #{tpu_custom_call.1} parent=1 // pred_check
      _
    $region19: #{tpu_custom_call.1} parent=1 // pred_check_branch
      %30 = sbr.rel (0) target = $region21
    $region20: #{tpu_custom_call.1} parent=1 // pred_region
      _
    $region21: #{tpu_custom_call.1} parent=1 // pred_fallthru
      _
    // Predicated region
    $region22: #{tpu_custom_call.1} parent=1 // pred_check
      _
    $region23: #{tpu_custom_call.1} parent=1 // pred_check_branch
      %32 = sbr.rel (0) target = $region25
    $region24: #{tpu_custom_call.1} parent=1 // pred_region
      _
    $region25: #{tpu_custom_call.1} parent=1 // pred_fallthru
      _
    // Predicated region
    $region26: #{tpu_custom_call.1} parent=1 // pred_check
      _
    $region27: #{tpu_custom_call.1} parent=1 // pred_check_branch
      %34 = sbr.rel (0) target = $region29
    $region28: #{tpu_custom_call.1} parent=1 // pred_region
      _
    $region29: #{tpu_custom_call.1} parent=1 // pred_fallthru
      _
    // Predicated region
    $region30: #{tpu_custom_call.1} parent=1 // pred_check
      _
    $region31: #{tpu_custom_call.1} parent=1 // pred_check_branch
      %36 = sbr.rel (0) target = $region33
    $region32: #{tpu_custom_call.1} parent=1 // pred_region
      %38 = dma.done [#allocation4], 16
    $region33: #{tpu_custom_call.1} parent=1 // pred_fallthru
      _
    %39 = sfence
    %v40 = vld [vmem:[%s1] sm:$0xff]
    %v41 = vld [vmem:[%s1 + $0x8] sm:$0xff]
    %v42 = vld [vmem:[%s1 + $0x10] sm:$0xff]
    %v43 = vld [vmem:[%s1 + $0x18] sm:$0xff]
    %v44 = vld [vmem:[%s1 + $0x20] sm:$0xff]
    %v45 = vld [vmem:[%s1 + $0x28] sm:$0xff]
    %v46 = vld [vmem:[%s1 + $0x30] sm:$0xff]
    %v47 = vld [vmem:[%s1 + $0x38] sm:$0xff]
    %v48 = vld [vmem:[%s1 + $0x40] sm:$0xff]
    %v49 = vld [vmem:[%s1 + $0x48] sm:$0xff]
    %v50 = vld [vmem:[%s1 + $0x50] sm:$0xff]
    %v51 = vld [vmem:[%s1 + $0x58] sm:$0xff]
    %v52 = vld [vmem:[%s1 + $0x60] sm:$0xff]
    %v53 = vld [vmem:[%s1 + $0x68] sm:$0xff]
    %v54 = vld [vmem:[%s1 + $0x70] sm:$0xff]
    %v55 = vld [vmem:[%s1 + $0x78] sm:$0xff]
    %v56 = vld [vmem:[%s1 + $0x80] sm:$0xff]
    %v57 = vld [vmem:[%s1 + $0x88] sm:$0xff]
    %v58 = vld [vmem:[%s1 + $0x90] sm:$0xff]
    %v59 = vld [vmem:[%s1 + $0x98] sm:$0xff]
    %v60 = vld [vmem:[%s1 + $0xa0] sm:$0xff]
    %v61 = vld [vmem:[%s1 + $0xa8] sm:$0xff]
    %v62 = vld [vmem:[%s1 + $0xb0] sm:$0xff]
    %v63 = vld [vmem:[%s1 + $0xb8] sm:$0xff]
    %v64 = vld [vmem:[%s1 + $0xc0] sm:$0xff]
    %v65 = vld [vmem:[%s1 + $0xc8] sm:$0xff]
    %v66 = vld [vmem:[%s1 + $0xd0] sm:$0xff]
    %v67 = vld [vmem:[%s1 + $0xd8] sm:$0xff]
    %v68 = vld [vmem:[%s1 + $0xe0] sm:$0xff]
    %v69 = vld [vmem:[%s1 + $0xe8] sm:$0xff]
    %v70 = vld [vmem:[%s1 + $0xf0] sm:$0xff]
    %v71 = vld [vmem:[%s1 + $0xf8] sm:$0xff]
    %v72 = vld [vmem:[%s1 + $0x100] sm:$0xff]
    %v73 = vld [vmem:[%s1 + $0x108] sm:$0xff]
    %v74 = vld [vmem:[%s1 + $0x110] sm:$0xff]
    %v75 = vld [vmem:[%s1 + $0x118] sm:$0xff]
    %v76 = vld [vmem:[%s1 + $0x120] sm:$0xff]
    %v77 = vld [vmem:[%s1 + $0x128] sm:$0xff]
    %v78 = vld [vmem:[%s1 + $0x130] sm:$0xff]
    %v79 = vld [vmem:[%s1 + $0x138] sm:$0xff]
    %v80 = vld [vmem:[%s1 + $0x140] sm:$0xff]
    %v81 = vld [vmem:[%s1 + $0x148] sm:$0xff]
    %v82 = vld [vmem:[%s1 + $0x150] sm:$0xff]
    %v83 = vld [vmem:[%s1 + $0x158] sm:$0xff]
    %v84 = vld [vmem:[%s1 + $0x160] sm:$0xff]
    %v85 = vld [vmem:[%s1 + $0x168] sm:$0xff]
    %v86 = vld [vmem:[%s1 + $0x170] sm:$0xff]
    %v87 = vld [vmem:[%s1 + $0x178] sm:$0xff]
    %v88 = vld [vmem:[%s1 + $0x180] sm:$0xff]
    %v89 = vld [vmem:[%s1 + $0x188] sm:$0xff]
    %v90 = vld [vmem:[%s1 + $0x190] sm:$0xff]
    %v91 = vld [vmem:[%s1 + $0x198] sm:$0xff]
    %v92 = vld [vmem:[%s1 + $0x1a0] sm:$0xff]
    %v93 = vld [vmem:[%s1 + $0x1a8] sm:$0xff]
    %v94 = vld [vmem:[%s1 + $0x1b0] sm:$0xff]
    %v95 = vld [vmem:[%s1 + $0x1b8] sm:$0xff]
    %v96 = vld [vmem:[%s1 + $0x1c0] sm:$0xff]
    %v97 = vld [vmem:[%s1 + $0x1c8] sm:$0xff]
    %v98 = vld [vmem:[%s1 + $0x1d0] sm:$0xff]
    %v99 = vld [vmem:[%s1 + $0x1d8] sm:$0xff]
    %v100 = vld [vmem:[%s1 + $0x1e0] sm:$0xff]
    %v101 = vld [vmem:[%s1 + $0x1e8] sm:$0xff]
    %v102 = vld [vmem:[%s1 + $0x1f0] sm:$0xff]
    %v103 = vld [vmem:[%s1 + $0x1f8] sm:$0xff]
    %v104 = vld [vmem:[%s2] sm:$0xff]
    %v105 = vld [vmem:[%s2 + $0x8] sm:$0xff]
    %v106 = vld [vmem:[%s2 + $0x10] sm:$0xff]
    %v107 = vld [vmem:[%s2 + $0x18] sm:$0xff]
    %v108 = vld [vmem:[%s3] sm:$0x1]
    %v110 = vperm.slane %v108, 0
    %vm112 = vcmask 261120
    %v114 = vsel %vm112, %v40, 0
    %v117 = vsel %vm112, %v41, 0
    %v120 = vsel %vm112, %v42, 0
    %v123 = vsel %vm112, %v43, 0
    %v126 = vsel %vm112, %v44, 0
    %v129 = vsel %vm112, %v45, 0
    %v132 = vsel %vm112, %v46, 0
    %v135 = vsel %vm112, %v47, 0
    %v138 = vsel %vm112, %v48, 0
    %v141 = vsel %vm112, %v49, 0
    %v144 = vsel %vm112, %v50, 0
    %v147 = vsel %vm112, %v51, 0
    %v150 = vsel %vm112, %v52, 0
    %v153 = vsel %vm112, %v53, 0
    %v156 = vsel %vm112, %v54, 0
    %v159 = vsel %vm112, %v55, 0
    %v162 = vsel %vm112, %v56, 0
    %v165 = vsel %vm112, %v57, 0
    %v168 = vsel %vm112, %v58, 0
    %v171 = vsel %vm112, %v59, 0
    %v174 = vsel %vm112, %v60, 0
    %v177 = vsel %vm112, %v61, 0
    %v180 = vsel %vm112, %v62, 0
    %v183 = vsel %vm112, %v63, 0
    %v186 = vsel %vm112, %v64, 0
    %v189 = vsel %vm112, %v65, 0
    %v192 = vsel %vm112, %v66, 0
    %v195 = vsel %vm112, %v67, 0
    %v198 = vsel %vm112, %v68, 0
    %v201 = vsel %vm112, %v69, 0
    %v204 = vsel %vm112, %v70, 0
    %v207 = vsel %vm112, %v71, 0
    %v210 = vsel %vm112, %v72, 0
    %v213 = vsel %vm112, %v73, 0
    %v216 = vsel %vm112, %v74, 0
    %v219 = vsel %vm112, %v75, 0
    %v222 = vsel %vm112, %v76, 0
    %v225 = vsel %vm112, %v77, 0
    %v228 = vsel %vm112, %v78, 0
    %v231 = vsel %vm112, %v79, 0
    %v234 = vsel %vm112, %v80, 0
    %v237 = vsel %vm112, %v81, 0
    %v240 = vsel %vm112, %v82, 0
    %v243 = vsel %vm112, %v83, 0
    %v246 = vsel %vm112, %v84, 0
    %v249 = vsel %vm112, %v85, 0
    %v252 = vsel %vm112, %v86, 0
    %v255 = vsel %vm112, %v87, 0
    %v258 = vsel %vm112, %v88, 0
    %v261 = vsel %vm112, %v89, 0
    %v264 = vsel %vm112, %v90, 0
    %v267 = vsel %vm112, %v91, 0
    %v270 = vsel %vm112, %v92, 0
    %v273 = vsel %vm112, %v93, 0
    %v276 = vsel %vm112, %v94, 0
    %v279 = vsel %vm112, %v95, 0
    %v282 = vsel %vm112, %v96, 0
    %v285 = vsel %vm112, %v97, 0
    %v288 = vsel %vm112, %v98, 0
    %v291 = vsel %vm112, %v99, 0
    %v294 = vsel %vm112, %v100, 0
    %v297 = vsel %vm112, %v101, 0
    %v300 = vsel %vm112, %v102, 0
    %v303 = vsel %vm112, %v103, 0
    %305 = vmatpush.msra.mxu0 0.0
    %306 = vmatpush.msra.mxu0 0.0
    %307 = vmatpush.msra.mxu0 0.0
    %308 = vmatpush.msra.mxu0 0.0
    %309 = vmatpush.msra.mxu0 0.0
    %310 = vmatpush.msra.mxu0 0.0
    %311 = vmatpush.msra.mxu0 0.0
    %312 = vmatpush.msra.mxu0 0.0
    %313 = vmatpush.msra.mxu0 0.0
    %314 = vmatpush.msra.mxu0 0.0
    %315 = vmatpush.msra.mxu0 0.0
    %316 = vmatpush.msra.mxu0 0.0
    %317 = vmatpush.msra.mxu0 %v107
    %318 = vmatpush.msra.mxu0 %v106
    %319 = vmatpush.msra.mxu0 %v105
    %320 = vmatpush.msra.mxu0 %v104
    %321 = vmatmul.f32.gmra.mxu0 %v114
    %v322 = vpop.f32.mrf.mxu0
    %v323 = vadd.f32 %v110, %v322
    %324 = vmatmul.f32.gmra.mxu0 %v117
    %v325 = vpop.f32.mrf.mxu0
    %v326 = vadd.f32 %v110, %v325
    %327 = vmatmul.f32.gmra.mxu0 %v120
    %v328 = vpop.f32.mrf.mxu0
    %v329 = vadd.f32 %v110, %v328
    %330 = vmatmul.f32.gmra.mxu0 %v123
    %v331 = vpop.f32.mrf.mxu0
    %v332 = vadd.f32 %v110, %v331
    %333 = vmatmul.f32.gmra.mxu0 %v126
    %v334 = vpop.f32.mrf.mxu0
    %v335 = vadd.f32 %v110, %v334
    %336 = vmatmul.f32.gmra.mxu0 %v129
    %v337 = vpop.f32.mrf.mxu0
    %v338 = vadd.f32 %v110, %v337
    %339 = vmatmul.f32.gmra.mxu0 %v132
    %v340 = vpop.f32.mrf.mxu0
    %v341 = vadd.f32 %v110, %v340
    %342 = vmatmul.f32.gmra.mxu0 %v135
    %v343 = vpop.f32.mrf.mxu0
    %v344 = vadd.f32 %v110, %v343
    %345 = vmatmul.f32.gmra.mxu0 %v138
    %v346 = vpop.f32.mrf.mxu0
    %v347 = vadd.f32 %v110, %v346
    %348 = vmatmul.f32.gmra.mxu0 %v141
    %v349 = vpop.f32.mrf.mxu0
    %v350 = vadd.f32 %v110, %v349
    %351 = vmatmul.f32.gmra.mxu0 %v144
    %v352 = vpop.f32.mrf.mxu0
    %v353 = vadd.f32 %v110, %v352
    %354 = vmatmul.f32.gmra.mxu0 %v147
    %v355 = vpop.f32.mrf.mxu0
    %v356 = vadd.f32 %v110, %v355
    %357 = vmatmul.f32.gmra.mxu0 %v150
    %v358 = vpop.f32.mrf.mxu0
    %v359 = vadd.f32 %v110, %v358
    %360 = vmatmul.f32.gmra.mxu0 %v153
    %v361 = vpop.f32.mrf.mxu0
    %v362 = vadd.f32 %v110, %v361
    %363 = vmatmul.f32.gmra.mxu0 %v156
    %v364 = vpop.f32.mrf.mxu0
    %v365 = vadd.f32 %v110, %v364
    %366 = vmatmul.f32.gmra.mxu0 %v159
    %v367 = vpop.f32.mrf.mxu0
    %v368 = vadd.f32 %v110, %v367
    %369 = vmatmul.f32.gmra.mxu0 %v162
    %v370 = vpop.f32.mrf.mxu0
    %v371 = vadd.f32 %v110, %v370
    %372 = vmatmul.f32.gmra.mxu0 %v165
    %v373 = vpop.f32.mrf.mxu0
    %v374 = vadd.f32 %v110, %v373
    %375 = vmatmul.f32.gmra.mxu0 %v168
    %v376 = vpop.f32.mrf.mxu0
    %v377 = vadd.f32 %v110, %v376
    %378 = vmatmul.f32.gmra.mxu0 %v171
    %v379 = vpop.f32.mrf.mxu0
    %v380 = vadd.f32 %v110, %v379
    %381 = vmatmul.f32.gmra.mxu0 %v174
    %v382 = vpop.f32.mrf.mxu0
    %v383 = vadd.f32 %v110, %v382
    %384 = vmatmul.f32.gmra.mxu0 %v177
    %v385 = vpop.f32.mrf.mxu0
    %v386 = vadd.f32 %v110, %v385
    %387 = vmatmul.f32.gmra.mxu0 %v180
    %v388 = vpop.f32.mrf.mxu0
    %v389 = vadd.f32 %v110, %v388
    %390 = vmatmul.f32.gmra.mxu0 %v183
    %v391 = vpop.f32.mrf.mxu0
    %v392 = vadd.f32 %v110, %v391
    %393 = vmatmul.f32.gmra.mxu0 %v186
    %v394 = vpop.f32.mrf.mxu0
    %v395 = vadd.f32 %v110, %v394
    %396 = vmatmul.f32.gmra.mxu0 %v189
    %v397 = vpop.f32.mrf.mxu0
    %v398 = vadd.f32 %v110, %v397
    %399 = vmatmul.f32.gmra.mxu0 %v192
    %v400 = vpop.f32.mrf.mxu0
    %v401 = vadd.f32 %v110, %v400
    %402 = vmatmul.f32.gmra.mxu0 %v195
    %v403 = vpop.f32.mrf.mxu0
    %v404 = vadd.f32 %v110, %v403
    %405 = vmatmul.f32.gmra.mxu0 %v198
    %v406 = vpop.f32.mrf.mxu0
    %v407 = vadd.f32 %v110, %v406
    %408 = vmatmul.f32.gmra.mxu0 %v201
    %v409 = vpop.f32.mrf.mxu0
    %v410 = vadd.f32 %v110, %v409
    %411 = vmatmul.f32.gmra.mxu0 %v204
    %v412 = vpop.f32.mrf.mxu0
    %v413 = vadd.f32 %v110, %v412
    %414 = vmatmul.f32.gmra.mxu0 %v207
    %v415 = vpop.f32.mrf.mxu0
    %v416 = vadd.f32 %v110, %v415
    %417 = vmatmul.f32.gmra.mxu0 %v210
    %v418 = vpop.f32.mrf.mxu0
    %v419 = vadd.f32 %v110, %v418
    %420 = vmatmul.f32.gmra.mxu0 %v213
    %v421 = vpop.f32.mrf.mxu0
    %v422 = vadd.f32 %v110, %v421
    %423 = vmatmul.f32.gmra.mxu0 %v216
    %v424 = vpop.f32.mrf.mxu0
    %v425 = vadd.f32 %v110, %v424
    %426 = vmatmul.f32.gmra.mxu0 %v219
    %v427 = vpop.f32.mrf.mxu0
    %v428 = vadd.f32 %v110, %v427
    %429 = vmatmul.f32.gmra.mxu0 %v222
    %v430 = vpop.f32.mrf.mxu0
    %v431 = vadd.f32 %v110, %v430
    %432 = vmatmul.f32.gmra.mxu0 %v225
    %v433 = vpop.f32.mrf.mxu0
    %v434 = vadd.f32 %v110, %v433
    %435 = vmatmul.f32.gmra.mxu0 %v228
    %v436 = vpop.f32.mrf.mxu0
    %v437 = vadd.f32 %v110, %v436
    %438 = vmatmul.f32.gmra.mxu0 %v231
    %v439 = vpop.f32.mrf.mxu0
    %v440 = vadd.f32 %v110, %v439
    %441 = vmatmul.f32.gmra.mxu0 %v234
    %v442 = vpop.f32.mrf.mxu0
    %v443 = vadd.f32 %v110, %v442
    %444 = vmatmul.f32.gmra.mxu0 %v237
    %v445 = vpop.f32.mrf.mxu0
    %v446 = vadd.f32 %v110, %v445
    %447 = vmatmul.f32.gmra.mxu0 %v240
    %v448 = vpop.f32.mrf.mxu0
    %v449 = vadd.f32 %v110, %v448
    %450 = vmatmul.f32.gmra.mxu0 %v243
    %v451 = vpop.f32.mrf.mxu0
    %v452 = vadd.f32 %v110, %v451
    %453 = vmatmul.f32.gmra.mxu0 %v246
    %v454 = vpop.f32.mrf.mxu0
    %v455 = vadd.f32 %v110, %v454
    %456 = vmatmul.f32.gmra.mxu0 %v249
    %v457 = vpop.f32.mrf.mxu0
    %v458 = vadd.f32 %v110, %v457
    %459 = vmatmul.f32.gmra.mxu0 %v252
    %v460 = vpop.f32.mrf.mxu0
    %v461 = vadd.f32 %v110, %v460
    %462 = vmatmul.f32.gmra.mxu0 %v255
    %v463 = vpop.f32.mrf.mxu0
    %v464 = vadd.f32 %v110, %v463
    %465 = vmatmul.f32.gmra.mxu0 %v258
    %v466 = vpop.f32.mrf.mxu0
    %v467 = vadd.f32 %v110, %v466
    %468 = vmatmul.f32.gmra.mxu0 %v261
    %v469 = vpop.f32.mrf.mxu0
    %v470 = vadd.f32 %v110, %v469
    %471 = vmatmul.f32.gmra.mxu0 %v264
    %v472 = vpop.f32.mrf.mxu0
    %v473 = vadd.f32 %v110, %v472
    %474 = vmatmul.f32.gmra.mxu0 %v267
    %v475 = vpop.f32.mrf.mxu0
    %v476 = vadd.f32 %v110, %v475
    %477 = vmatmul.f32.gmra.mxu0 %v270
    %v478 = vpop.f32.mrf.mxu0
    %v479 = vadd.f32 %v110, %v478
    %480 = vmatmul.f32.gmra.mxu0 %v273
    %v481 = vpop.f32.mrf.mxu0
    %v482 = vadd.f32 %v110, %v481
    %483 = vmatmul.f32.gmra.mxu0 %v276
    %v484 = vpop.f32.mrf.mxu0
    %v485 = vadd.f32 %v110, %v484
    %486 = vmatmul.f32.gmra.mxu0 %v279
    %v487 = vpop.f32.mrf.mxu0
    %v488 = vadd.f32 %v110, %v487
    %489 = vmatmul.f32.gmra.mxu0 %v282
    %v490 = vpop.f32.mrf.mxu0
    %v491 = vadd.f32 %v110, %v490
    %492 = vmatmul.f32.gmra.mxu0 %v285
    %v493 = vpop.f32.mrf.mxu0
    %v494 = vadd.f32 %v110, %v493
    %495 = vmatmul.f32.gmra.mxu0 %v288
    %v496 = vpop.f32.mrf.mxu0
    %v497 = vadd.f32 %v110, %v496
    %498 = vmatmul.f32.gmra.mxu0 %v291
    %v499 = vpop.f32.mrf.mxu0
    %v500 = vadd.f32 %v110, %v499
    %501 = vmatmul.f32.gmra.mxu0 %v294
    %v502 = vpop.f32.mrf.mxu0
    %v503 = vadd.f32 %v110, %v502
    %504 = vmatmul.f32.gmra.mxu0 %v297
    %v505 = vpop.f32.mrf.mxu0
    %v506 = vadd.f32 %v110, %v505
    %507 = vmatmul.f32.gmra.mxu0 %v300
    %v508 = vpop.f32.mrf.mxu0
    %v509 = vadd.f32 %v110, %v508
    %510 = vmatmul.f32.gmra.mxu0 %v303
    %v511 = vpop.f32.mrf.mxu0
    %v512 = vadd.f32 %v110, %v511
    %513 = vdwg.mxu0
    %v514 = vmax.f32 %v323, 0.0
    %v515 = vmax.f32 %v326, 0.0
    %v516 = vmax.f32 %v329, 0.0
    %v517 = vmax.f32 %v332, 0.0
    %v518 = vmax.f32 %v335, 0.0
    %v519 = vmax.f32 %v338, 0.0
    %v520 = vmax.f32 %v341, 0.0
    %v521 = vmax.f32 %v344, 0.0
    %v522 = vmax.f32 %v347, 0.0
    %v523 = vmax.f32 %v350, 0.0
    %v524 = vmax.f32 %v353, 0.0
    %v525 = vmax.f32 %v356, 0.0
    %v526 = vmax.f32 %v359, 0.0
    %v527 = vmax.f32 %v362, 0.0
    %v528 = vmax.f32 %v365, 0.0
    %v529 = vmax.f32 %v368, 0.0
    %v530 = vmax.f32 %v371, 0.0
    %v531 = vmax.f32 %v374, 0.0
    %v532 = vmax.f32 %v377, 0.0
    %v533 = vmax.f32 %v380, 0.0
    %v534 = vmax.f32 %v383, 0.0
    %v535 = vmax.f32 %v386, 0.0
    %v536 = vmax.f32 %v389, 0.0
    %v537 = vmax.f32 %v392, 0.0
    %v538 = vmax.f32 %v395, 0.0
    %v539 = vmax.f32 %v398, 0.0
    %v540 = vmax.f32 %v401, 0.0
    %v541 = vmax.f32 %v404, 0.0
    %v542 = vmax.f32 %v407, 0.0
    %v543 = vmax.f32 %v410, 0.0
    %v544 = vmax.f32 %v413, 0.0
    %v545 = vmax.f32 %v416, 0.0
    %v546 = vmax.f32 %v419, 0.0
    %v547 = vmax.f32 %v422, 0.0
    %v548 = vmax.f32 %v425, 0.0
    %v549 = vmax.f32 %v428, 0.0
    %v550 = vmax.f32 %v431, 0.0
    %v551 = vmax.f32 %v434, 0.0
    %v552 = vmax.f32 %v437, 0.0
    %v553 = vmax.f32 %v440, 0.0
    %v554 = vmax.f32 %v443, 0.0
    %v555 = vmax.f32 %v446, 0.0
    %v556 = vmax.f32 %v449, 0.0
    %v557 = vmax.f32 %v452, 0.0
    %v558 = vmax.f32 %v455, 0.0
    %v559 = vmax.f32 %v458, 0.0
    %v560 = vmax.f32 %v461, 0.0
    %v561 = vmax.f32 %v464, 0.0
    %v562 = vmax.f32 %v467, 0.0
    %v563 = vmax.f32 %v470, 0.0
    %v564 = vmax.f32 %v473, 0.0
    %v565 = vmax.f32 %v476, 0.0
    %v566 = vmax.f32 %v479, 0.0
    %v567 = vmax.f32 %v482, 0.0
    %v568 = vmax.f32 %v485, 0.0
    %v569 = vmax.f32 %v488, 0.0
    %v570 = vmax.f32 %v491, 0.0
    %v571 = vmax.f32 %v494, 0.0
    %v572 = vmax.f32 %v497, 0.0
    %v573 = vmax.f32 %v500, 0.0
    %v574 = vmax.f32 %v503, 0.0
    %v575 = vmax.f32 %v506, 0.0
    %v576 = vmax.f32 %v509, 0.0
    %v577 = vmax.f32 %v512, 0.0
    %v578 = vld [vmem:[%s4] sm:$0xff]
    %v579 = vld [vmem:[%s4 + $0x8] sm:$0xff]
    %v580 = vld [vmem:[%s4 + $0x10] sm:$0xff]
    %v581 = vld [vmem:[%s4 + $0x18] sm:$0xff]
    %v582 = vld [vmem:[%s4 + $0x20] sm:$0xff]
    %v583 = vld [vmem:[%s4 + $0x28] sm:$0xff]
    %v584 = vld [vmem:[%s4 + $0x30] sm:$0xff]
    %v585 = vld [vmem:[%s4 + $0x38] sm:$0xff]
    %v586 = vld [vmem:[%s4 + $0x40] sm:$0xff]
    %v587 = vld [vmem:[%s4 + $0x48] sm:$0xff]
    %v588 = vld [vmem:[%s4 + $0x50] sm:$0xff]
    %v589 = vld [vmem:[%s4 + $0x58] sm:$0xff]
    %v590 = vld [vmem:[%s4 + $0x60] sm:$0xff]
    %v591 = vld [vmem:[%s4 + $0x68] sm:$0xff]
    %v592 = vld [vmem:[%s4 + $0x70] sm:$0xff]
    %v593 = vld [vmem:[%s4 + $0x78] sm:$0xff]
    %v594 = vld [vmem:[%s5] sm:$0x1]
    %v596 = vperm.slane %v594, 0
    %598 = vmatpush.msra.mxu0 %v593
    %599 = vmatpush.msra.mxu0 %v592
    %600 = vmatpush.msra.mxu0 %v591
    %601 = vmatpush.msra.mxu0 %v590
    %602 = vmatpush.msra.mxu0 %v589
    %603 = vmatpush.msra.mxu0 %v588
    %604 = vmatpush.msra.mxu0 %v587
    %605 = vmatpush.msra.mxu0 %v586
    %606 = vmatpush.msra.mxu0 %v585
    %607 = vmatpush.msra.mxu0 %v584
    %608 = vmatpush.msra.mxu0 %v583
    %609 = vmatpush.msra.mxu0 %v582
    %610 = vmatpush.msra.mxu0 %v581
    %611 = vmatpush.msra.mxu0 %v580
    %612 = vmatpush.msra.mxu0 %v579
    %613 = vmatpush.msra.mxu0 %v578
    %614 = vmatmul.f32.gmra.mxu0 %v514
    %v615 = vpop.f32.mrf.mxu0
    %v616 = vadd.f32 %v596, %v615
    %617 = vmatmul.f32.gmra.mxu0 %v515
    %v618 = vpop.f32.mrf.mxu0
    %v619 = vadd.f32 %v596, %v618
    %620 = vmatmul.f32.gmra.mxu0 %v516
    %v621 = vpop.f32.mrf.mxu0
    %v622 = vadd.f32 %v596, %v621
    %623 = vmatmul.f32.gmra.mxu0 %v517
    %v624 = vpop.f32.mrf.mxu0
    %v625 = vadd.f32 %v596, %v624
    %626 = vmatmul.f32.gmra.mxu0 %v518
    %v627 = vpop.f32.mrf.mxu0
    %v628 = vadd.f32 %v596, %v627
    %629 = vmatmul.f32.gmra.mxu0 %v519
    %v630 = vpop.f32.mrf.mxu0
    %v631 = vadd.f32 %v596, %v630
    %632 = vmatmul.f32.gmra.mxu0 %v520
    %v633 = vpop.f32.mrf.mxu0
    %v634 = vadd.f32 %v596, %v633
    %635 = vmatmul.f32.gmra.mxu0 %v521
    %v636 = vpop.f32.mrf.mxu0
    %v637 = vadd.f32 %v596, %v636
    %638 = vmatmul.f32.gmra.mxu0 %v522
    %v639 = vpop.f32.mrf.mxu0
    %v640 = vadd.f32 %v596, %v639
    %641 = vmatmul.f32.gmra.mxu0 %v523
    %v642 = vpop.f32.mrf.mxu0
    %v643 = vadd.f32 %v596, %v642
    %644 = vmatmul.f32.gmra.mxu0 %v524
    %v645 = vpop.f32.mrf.mxu0
    %v646 = vadd.f32 %v596, %v645
    %647 = vmatmul.f32.gmra.mxu0 %v525
    %v648 = vpop.f32.mrf.mxu0
    %v649 = vadd.f32 %v596, %v648
    %650 = vmatmul.f32.gmra.mxu0 %v526
    %v651 = vpop.f32.mrf.mxu0
    %v652 = vadd.f32 %v596, %v651
    %653 = vmatmul.f32.gmra.mxu0 %v527
    %v654 = vpop.f32.mrf.mxu0
    %v655 = vadd.f32 %v596, %v654
    %656 = vmatmul.f32.gmra.mxu0 %v528
    %v657 = vpop.f32.mrf.mxu0
    %v658 = vadd.f32 %v596, %v657
    %659 = vmatmul.f32.gmra.mxu0 %v529
    %v660 = vpop.f32.mrf.mxu0
    %v661 = vadd.f32 %v596, %v660
    %662 = vmatmul.f32.gmra.mxu0 %v530
    %v663 = vpop.f32.mrf.mxu0
    %v664 = vadd.f32 %v596, %v663
    %665 = vmatmul.f32.gmra.mxu0 %v531
    %v666 = vpop.f32.mrf.mxu0
    %v667 = vadd.f32 %v596, %v666
    %668 = vmatmul.f32.gmra.mxu0 %v532
    %v669 = vpop.f32.mrf.mxu0
    %v670 = vadd.f32 %v596, %v669
    %671 = vmatmul.f32.gmra.mxu0 %v533
    %v672 = vpop.f32.mrf.mxu0
    %v673 = vadd.f32 %v596, %v672
    %674 = vmatmul.f32.gmra.mxu0 %v534
    %v675 = vpop.f32.mrf.mxu0
    %v676 = vadd.f32 %v596, %v675
    %677 = vmatmul.f32.gmra.mxu0 %v535
    %v678 = vpop.f32.mrf.mxu0
    %v679 = vadd.f32 %v596, %v678
    %680 = vmatmul.f32.gmra.mxu0 %v536
    %v681 = vpop.f32.mrf.mxu0
    %v682 = vadd.f32 %v596, %v681
    %683 = vmatmul.f32.gmra.mxu0 %v537
    %v684 = vpop.f32.mrf.mxu0
    %v685 = vadd.f32 %v596, %v684
    %686 = vmatmul.f32.gmra.mxu0 %v538
    %v687 = vpop.f32.mrf.mxu0
    %v688 = vadd.f32 %v596, %v687
    %689 = vmatmul.f32.gmra.mxu0 %v539
    %v690 = vpop.f32.mrf.mxu0
    %v691 = vadd.f32 %v596, %v690
    %692 = vmatmul.f32.gmra.mxu0 %v540
    %v693 = vpop.f32.mrf.mxu0
    %v694 = vadd.f32 %v596, %v693
    %695 = vmatmul.f32.gmra.mxu0 %v541
    %v696 = vpop.f32.mrf.mxu0
    %v697 = vadd.f32 %v596, %v696
    %698 = vmatmul.f32.gmra.mxu0 %v542
    %v699 = vpop.f32.mrf.mxu0
    %v700 = vadd.f32 %v596, %v699
    %701 = vmatmul.f32.gmra.mxu0 %v543
    %v702 = vpop.f32.mrf.mxu0
    %v703 = vadd.f32 %v596, %v702
    %704 = vmatmul.f32.gmra.mxu0 %v544
    %v705 = vpop.f32.mrf.mxu0
    %v706 = vadd.f32 %v596, %v705
    %707 = vmatmul.f32.gmra.mxu0 %v545
    %v708 = vpop.f32.mrf.mxu0
    %v709 = vadd.f32 %v596, %v708
    %710 = vmatmul.f32.gmra.mxu0 %v546
    %v711 = vpop.f32.mrf.mxu0
    %v712 = vadd.f32 %v596, %v711
    %713 = vmatmul.f32.gmra.mxu0 %v547
    %v714 = vpop.f32.mrf.mxu0
    %v715 = vadd.f32 %v596, %v714
    %716 = vmatmul.f32.gmra.mxu0 %v548
    %v717 = vpop.f32.mrf.mxu0
    %v718 = vadd.f32 %v596, %v717
    %719 = vmatmul.f32.gmra.mxu0 %v549
    %v720 = vpop.f32.mrf.mxu0
    %v721 = vadd.f32 %v596, %v720
    %722 = vmatmul.f32.gmra.mxu0 %v550
    %v723 = vpop.f32.mrf.mxu0
    %v724 = vadd.f32 %v596, %v723
    %725 = vmatmul.f32.gmra.mxu0 %v551
    %v726 = vpop.f32.mrf.mxu0
    %v727 = vadd.f32 %v596, %v726
    %728 = vmatmul.f32.gmra.mxu0 %v552
    %v729 = vpop.f32.mrf.mxu0
    %v730 = vadd.f32 %v596, %v729
    %731 = vmatmul.f32.gmra.mxu0 %v553
    %v732 = vpop.f32.mrf.mxu0
    %v733 = vadd.f32 %v596, %v732
    %734 = vmatmul.f32.gmra.mxu0 %v554
    %v735 = vpop.f32.mrf.mxu0
    %v736 = vadd.f32 %v596, %v735
    %737 = vmatmul.f32.gmra.mxu0 %v555
    %v738 = vpop.f32.mrf.mxu0
    %v739 = vadd.f32 %v596, %v738
    %740 = vmatmul.f32.gmra.mxu0 %v556
    %v741 = vpop.f32.mrf.mxu0
    %v742 = vadd.f32 %v596, %v741
    %743 = vmatmul.f32.gmra.mxu0 %v557
    %v744 = vpop.f32.mrf.mxu0
    %v745 = vadd.f32 %v596, %v744
    %746 = vmatmul.f32.gmra.mxu0 %v558
    %v747 = vpop.f32.mrf.mxu0
    %v748 = vadd.f32 %v596, %v747
    %749 = vmatmul.f32.gmra.mxu0 %v559
    %v750 = vpop.f32.mrf.mxu0
    %v751 = vadd.f32 %v596, %v750
    %752 = vmatmul.f32.gmra.mxu0 %v560
    %v753 = vpop.f32.mrf.mxu0
    %v754 = vadd.f32 %v596, %v753
    %755 = vmatmul.f32.gmra.mxu0 %v561
    %v756 = vpop.f32.mrf.mxu0
    %v757 = vadd.f32 %v596, %v756
    %758 = vmatmul.f32.gmra.mxu0 %v562
    %v759 = vpop.f32.mrf.mxu0
    %v760 = vadd.f32 %v596, %v759
    %761 = vmatmul.f32.gmra.mxu0 %v563
    %v762 = vpop.f32.mrf.mxu0
    %v763 = vadd.f32 %v596, %v762
    %764 = vmatmul.f32.gmra.mxu0 %v564
    %v765 = vpop.f32.mrf.mxu0
    %v766 = vadd.f32 %v596, %v765
    %767 = vmatmul.f32.gmra.mxu0 %v565
    %v768 = vpop.f32.mrf.mxu0
    %v769 = vadd.f32 %v596, %v768
    %770 = vmatmul.f32.gmra.mxu0 %v566
    %v771 = vpop.f32.mrf.mxu0
    %v772 = vadd.f32 %v596, %v771
    %773 = vmatmul.f32.gmra.mxu0 %v567
    %v774 = vpop.f32.mrf.mxu0
    %v775 = vadd.f32 %v596, %v774
    %776 = vmatmul.f32.gmra.mxu0 %v568
    %v777 = vpop.f32.mrf.mxu0
    %v778 = vadd.f32 %v596, %v777
    %779 = vmatmul.f32.gmra.mxu0 %v569
    %v780 = vpop.f32.mrf.mxu0
    %v781 = vadd.f32 %v596, %v780
    %782 = vmatmul.f32.gmra.mxu0 %v570
    %v783 = vpop.f32.mrf.mxu0
    %v784 = vadd.f32 %v596, %v783
    %785 = vmatmul.f32.gmra.mxu0 %v571
    %v786 = vpop.f32.mrf.mxu0
    %v787 = vadd.f32 %v596, %v786
    %788 = vmatmul.f32.gmra.mxu0 %v572
    %v789 = vpop.f32.mrf.mxu0
    %v790 = vadd.f32 %v596, %v789
    %791 = vmatmul.f32.gmra.mxu0 %v573
    %v792 = vpop.f32.mrf.mxu0
    %v793 = vadd.f32 %v596, %v792
    %794 = vmatmul.f32.gmra.mxu0 %v574
    %v795 = vpop.f32.mrf.mxu0
    %v796 = vadd.f32 %v596, %v795
    %797 = vmatmul.f32.gmra.mxu0 %v575
    %v798 = vpop.f32.mrf.mxu0
    %v799 = vadd.f32 %v596, %v798
    %800 = vmatmul.f32.gmra.mxu0 %v576
    %v801 = vpop.f32.mrf.mxu0
    %v802 = vadd.f32 %v596, %v801
    %803 = vmatmul.f32.gmra.mxu0 %v577
    %v804 = vpop.f32.mrf.mxu0
    %v805 = vadd.f32 %v596, %v804
    %806 = vdwg.mxu0
    %v807 = vmax.f32 %v616, 0.0
    %v808 = vmax.f32 %v619, 0.0
    %v809 = vmax.f32 %v622, 0.0
    %v810 = vmax.f32 %v625, 0.0
    %v811 = vmax.f32 %v628, 0.0
    %v812 = vmax.f32 %v631, 0.0
    %v813 = vmax.f32 %v634, 0.0
    %v814 = vmax.f32 %v637, 0.0
    %v815 = vmax.f32 %v640, 0.0
    %v816 = vmax.f32 %v643, 0.0
    %v817 = vmax.f32 %v646, 0.0
    %v818 = vmax.f32 %v649, 0.0
    %v819 = vmax.f32 %v652, 0.0
    %v820 = vmax.f32 %v655, 0.0
    %v821 = vmax.f32 %v658, 0.0
    %v822 = vmax.f32 %v661, 0.0
    %v823 = vmax.f32 %v664, 0.0
    %v824 = vmax.f32 %v667, 0.0
    %v825 = vmax.f32 %v670, 0.0
    %v826 = vmax.f32 %v673, 0.0
    %v827 = vmax.f32 %v676, 0.0
    %v828 = vmax.f32 %v679, 0.0
    %v829 = vmax.f32 %v682, 0.0
    %v830 = vmax.f32 %v685, 0.0
    %v831 = vmax.f32 %v688, 0.0
    %v832 = vmax.f32 %v691, 0.0
    %v833 = vmax.f32 %v694, 0.0
    %v834 = vmax.f32 %v697, 0.0
    %v835 = vmax.f32 %v700, 0.0
    %v836 = vmax.f32 %v703, 0.0
    %v837 = vmax.f32 %v706, 0.0
    %v838 = vmax.f32 %v709, 0.0
    %v839 = vmax.f32 %v712, 0.0
    %v840 = vmax.f32 %v715, 0.0
    %v841 = vmax.f32 %v718, 0.0
    %v842 = vmax.f32 %v721, 0.0
    %v843 = vmax.f32 %v724, 0.0
    %v844 = vmax.f32 %v727, 0.0
    %v845 = vmax.f32 %v730, 0.0
    %v846 = vmax.f32 %v733, 0.0
    %v847 = vmax.f32 %v736, 0.0
    %v848 = vmax.f32 %v739, 0.0
    %v849 = vmax.f32 %v742, 0.0
    %v850 = vmax.f32 %v745, 0.0
    %v851 = vmax.f32 %v748, 0.0
    %v852 = vmax.f32 %v751, 0.0
    %v853 = vmax.f32 %v754, 0.0
    %v854 = vmax.f32 %v757, 0.0
    %v855 = vmax.f32 %v760, 0.0
    %v856 = vmax.f32 %v763, 0.0
    %v857 = vmax.f32 %v766, 0.0
    %v858 = vmax.f32 %v769, 0.0
    %v859 = vmax.f32 %v772, 0.0
    %v860 = vmax.f32 %v775, 0.0
    %v861 = vmax.f32 %v778, 0.0
    %v862 = vmax.f32 %v781, 0.0
    %v863 = vmax.f32 %v784, 0.0
    %v864 = vmax.f32 %v787, 0.0
    %v865 = vmax.f32 %v790, 0.0
    %v866 = vmax.f32 %v793, 0.0
    %v867 = vmax.f32 %v796, 0.0
    %v868 = vmax.f32 %v799, 0.0
    %v869 = vmax.f32 %v802, 0.0
    %v870 = vmax.f32 %v805, 0.0
    %v871 = vld [vmem:[%s6] sm:$0xff]
    %872 = vmatpush.xpose.msra.mxu0 %v822
    %873 = vmatpush.xpose.msra.mxu0 %v821
    %874 = vmatpush.xpose.msra.mxu0 %v820
    %875 = vmatpush.xpose.msra.mxu0 %v819
    %876 = vmatpush.xpose.msra.mxu0 %v818
    %877 = vmatpush.xpose.msra.mxu0 %v817
    %878 = vmatpush.xpose.msra.mxu0 %v816
    %879 = vmatpush.xpose.msra.mxu0 %v815
    %880 = vmatpush.xpose.msra.mxu0 %v814
    %881 = vmatpush.xpose.msra.mxu0 %v813
    %882 = vmatpush.xpose.msra.mxu0 %v812
    %883 = vmatpush.xpose.msra.mxu0 %v811
    %884 = vmatpush.xpose.msra.mxu0 %v810
    %885 = vmatpush.xpose.msra.mxu0 %v809
    %886 = vmatpush.xpose.msra.mxu0 %v808
    %887 = vmatpush.xpose.msra.mxu0 %v807
    %888 = vmatmul.f32.gmra.mxu0 %v871
    %v889 = vpop.f32.mrf.mxu0
    %v890 = vadd.f32 0.0, %v889
    %891 = vdwg.mxu0
    %892 = vmatpush.xpose.msra.mxu0 %v838
    %893 = vmatpush.xpose.msra.mxu0 %v837
    %894 = vmatpush.xpose.msra.mxu0 %v836
    %895 = vmatpush.xpose.msra.mxu0 %v835
    %896 = vmatpush.xpose.msra.mxu0 %v834
    %897 = vmatpush.xpose.msra.mxu0 %v833
    %898 = vmatpush.xpose.msra.mxu0 %v832
    %899 = vmatpush.xpose.msra.mxu0 %v831
    %900 = vmatpush.xpose.msra.mxu0 %v830
    %901 = vmatpush.xpose.msra.mxu0 %v829
    %902 = vmatpush.xpose.msra.mxu0 %v828
    %903 = vmatpush.xpose.msra.mxu0 %v827
    %904 = vmatpush.xpose.msra.mxu0 %v826
    %905 = vmatpush.xpose.msra.mxu0 %v825
    %906 = vmatpush.xpose.msra.mxu0 %v824
    %907 = vmatpush.xpose.msra.mxu0 %v823
    %908 = vmatmul.f32.gmra.mxu0 %v871
    %v909 = vpop.f32.mrf.mxu0
    %v910 = vadd.f32 0.0, %v909
    %911 = vdwg.mxu0
    %912 = vmatpush.xpose.msra.mxu0 %v854
    %913 = vmatpush.xpose.msra.mxu0 %v853
    %914 = vmatpush.xpose.msra.mxu0 %v852
    %915 = vmatpush.xpose.msra.mxu0 %v851
    %916 = vmatpush.xpose.msra.mxu0 %v850
    %917 = vmatpush.xpose.msra.mxu0 %v849
    %918 = vmatpush.xpose.msra.mxu0 %v848
    %919 = vmatpush.xpose.msra.mxu0 %v847
    %920 = vmatpush.xpose.msra.mxu0 %v846
    %921 = vmatpush.xpose.msra.mxu0 %v845
    %922 = vmatpush.xpose.msra.mxu0 %v844
    %923 = vmatpush.xpose.msra.mxu0 %v843
    %924 = vmatpush.xpose.msra.mxu0 %v842
    %925 = vmatpush.xpose.msra.mxu0 %v841
    %926 = vmatpush.xpose.msra.mxu0 %v840
    %927 = vmatpush.xpose.msra.mxu0 %v839
    %928 = vmatmul.f32.gmra.mxu0 %v871
    %v929 = vpop.f32.mrf.mxu0
    %v930 = vadd.f32 0.0, %v929
    %931 = vdwg.mxu0
    %932 = vmatpush.xpose.msra.mxu0 %v870
    %933 = vmatpush.xpose.msra.mxu0 %v869
    %934 = vmatpush.xpose.msra.mxu0 %v868
    %935 = vmatpush.xpose.msra.mxu0 %v867
    %936 = vmatpush.xpose.msra.mxu0 %v866
    %937 = vmatpush.xpose.msra.mxu0 %v865
    %938 = vmatpush.xpose.msra.mxu0 %v864
    %939 = vmatpush.xpose.msra.mxu0 %v863
    %940 = vmatpush.xpose.msra.mxu0 %v862
    %941 = vmatpush.xpose.msra.mxu0 %v861
    %942 = vmatpush.xpose.msra.mxu0 %v860
    %943 = vmatpush.xpose.msra.mxu0 %v859
    %944 = vmatpush.xpose.msra.mxu0 %v858
    %945 = vmatpush.xpose.msra.mxu0 %v857
    %946 = vmatpush.xpose.msra.mxu0 %v856
    %947 = vmatpush.xpose.msra.mxu0 %v855
    %948 = vmatmul.f32.gmra.mxu0 %v871
    %v949 = vpop.f32.mrf.mxu0
    %v950 = vadd.f32 0.0, %v949
    %951 = vdwg.mxu0
    %s952 = sld [smem:[#allocation2]]
    %s953 = sld [smem:[#allocation2 + $0x1]]
    %s954 = sld [smem:[#allocation2 + $0x2]]
    %v955 = vstv %s954
    %v956 = vadd.f32 %v890, %v955
    %v957 = vadd.f32 %v910, %v955
    %v958 = vadd.f32 %v930, %v955
    %v959 = vadd.f32 %v950, %v955
    %v960 = vxor.u32 %v956, 2147483648
    %v961 = vxor.u32 %v957, 2147483648
    %v962 = vxor.u32 %v958, 2147483648
    %v963 = vxor.u32 %v959, 2147483648
    %v964 = vmul.f32 %v960, 1.442695
    %v965 = vpow.pop %v964
    %v966 = vmul.f32 %v961, 1.442695
    %v967 = vpow.pop %v966
    %v968 = vmul.f32 %v962, 1.442695
    %v969 = vpow.pop %v968
    %v970 = vmul.f32 %v963, 1.442695
    %v971 = vpow.pop %v970
    %v972 = vadd.f32 %v965, 1.0
    %v973 = vadd.f32 %v967, 1.0
    %v974 = vadd.f32 %v969, 1.0
    %v975 = vadd.f32 %v971, 1.0
    %v976 = vrcp.pop %v972
    %v977 = vmul.f32 %v972, %v976
    %v978 = vsub.f32 1.0, %v977
    %v979 = vmul.f32 %v976, %v978
    %v980 = vadd.f32 %v976, %v979
    %vm981 = vweird.f32 %v972
    %vm982 = vweird.f32 %v976
    %vm983 = vmor %vm981, %vm982
    %v984 = vsel %vm983, %v976, %v980
    %v985 = vand.u32 2147483647, %v972
    %vm986 = vcmp.eq.f32.partialorder %v985, 8.507059e+37
    %v987 = vand.u32 %v972, 2147483648
    %v988 = vor.u32 1.1754944e-38, %v987
    %v989 = vsel %vm986, %v988, %v984
    %v990 = vmul.f32 1.0, %v989
    %v991 = vrcp.pop %v973
    %v992 = vmul.f32 %v973, %v991
    %v993 = vsub.f32 1.0, %v992
    %v994 = vmul.f32 %v991, %v993
    %v995 = vadd.f32 %v991, %v994
    %vm996 = vweird.f32 %v973
    %vm997 = vweird.f32 %v991
    %vm998 = vmor %vm996, %vm997
    %v999 = vsel %vm998, %v991, %v995
    %v1000 = vand.u32 2147483647, %v973
    %vm1001 = vcmp.eq.f32.partialorder %v1000, 8.507059e+37
    %v1002 = vand.u32 %v973, 2147483648
    %v1003 = vor.u32 1.1754944e-38, %v1002
    %v1004 = vsel %vm1001, %v1003, %v999
    %v1005 = vmul.f32 1.0, %v1004
    %v1006 = vrcp.pop %v974
    %v1007 = vmul.f32 %v974, %v1006
    %v1008 = vsub.f32 1.0, %v1007
    %v1009 = vmul.f32 %v1006, %v1008
    %v1010 = vadd.f32 %v1006, %v1009
    %vm1011 = vweird.f32 %v974
    %vm1012 = vweird.f32 %v1006
    %vm1013 = vmor %vm1011, %vm1012
    %v1014 = vsel %vm1013, %v1006, %v1010
    %v1015 = vand.u32 2147483647, %v974
    %vm1016 = vcmp.eq.f32.partialorder %v1015, 8.507059e+37
    %v1017 = vand.u32 %v974, 2147483648
    %v1018 = vor.u32 1.1754944e-38, %v1017
    %v1019 = vsel %vm1016, %v1018, %v1014
    %v1020 = vmul.f32 1.0, %v1019
    %v1021 = vrcp.pop %v975
    %v1022 = vmul.f32 %v975, %v1021
    %v1023 = vsub.f32 1.0, %v1022
    %v1024 = vmul.f32 %v1021, %v1023
    %v1025 = vadd.f32 %v1021, %v1024
    %vm1026 = vweird.f32 %v975
    %vm1027 = vweird.f32 %v1021
    %vm1028 = vmor %vm1026, %vm1027
    %v1029 = vsel %vm1028, %v1021, %v1025
    %v1030 = vand.u32 2147483647, %v975
    %vm1031 = vcmp.eq.f32.partialorder %v1030, 8.507059e+37
    %v1032 = vand.u32 %v975, 2147483648
    %v1033 = vor.u32 1.1754944e-38, %v1032
    %v1034 = vsel %vm1031, %v1033, %v1029
    %v1035 = vmul.f32 1.0, %v1034
    %s1036 = ssub.f32 %s953, %s952
    %v1037 = vstv %s1036
    %v1038 = vmul.f32 %v990, %v1037
    %v1039 = vmul.f32 %v1005, %v1037
    %v1040 = vmul.f32 %v1020, %v1037
    %v1041 = vmul.f32 %v1035, %v1037
    %v1042 = vstv %s952
    %v1043 = vadd.f32 %v1038, %v1042
    %v1044 = vadd.f32 %v1039, %v1042
    %v1045 = vadd.f32 %v1040, %v1042
    %v1046 = vadd.f32 %v1041, %v1042
    %v1051 = vrot.slane %v1044, 7
    %v1052 = vrot.slane %v1045, 6
    %v1053 = vrot.slane %v1046, 5
    %vm1054 = vcmask 1040384
    %v1055 = vsel %vm1054, %v1043, %v1051
    %vm1056 = vcmask 1042434
    %v1057 = vsel %vm1056, %v1052, %v1053
    %vm1058 = vcmask 1041408
    %v1059 = vsel %vm1058, %v1055, %v1057
    %v1061 = vlaneseq
    %vm1062 = vcmp.ge.s32.totalorder %v1061, 0
    %vm1063 = vcmp.lt.s32.totalorder %v1061, 512
    %vm1064 = vmand %vm1062, %vm1063
    %1065 = vst.msk [vmem:[#allocation5] sm:$0xf] %vm1064, %v1059
    // Predicated region
    $region34: #{tpu_custom_call.1} parent=1 // pred_check
      _
    $region35: #{tpu_custom_call.1} parent=1 // pred_check_branch
      %1067 = sbr.rel (0) target = $region37
    $region36: #{tpu_custom_call.1} parent=1 // pred_region
      %1069 = vsyncadd [#allocation3], 0
      %s1071 = sshll.u32 [#allocation5], 4
      %s1072 = int_to_ptr.vmem [resolvable:$true] %s1071
      %s1073 = sshll.u32 %s7, 4
      %s1074 = int_to_ptr.hbm [resolvable:$true] %s1073
      %1076 = dma.vmem_to_hbm [thread:$0]  %s1072, 64, %s1074, [#allocation3]
    $region37: #{tpu_custom_call.1} parent=1 // pred_fallthru
      _
    // Predicated region
    $region38: #{tpu_custom_call.1} parent=1 // pred_check
      _
    $region39: #{tpu_custom_call.1} parent=1 // pred_check_branch
      %1078 = sbr.rel (0) target = $region41
    $region40: #{tpu_custom_call.1} parent=1 // pred_region
      %1080 = dma.done [#allocation3], 64
    $region41: #{tpu_custom_call.1} parent=1 // pred_fallthru
      _
    %1081 = vsyncpa [#allocation3], 1
    %1082 = vsyncpa [#allocation4], 1

</llo_original>
